<compile_context>
chip_gen: v5e
topology: v5e:2x2
jax: 0.10.0
libtpu: 0.0.40
codegen_flags: <defaults>
</compile_context>

<pallas_src>
import math

import jax
import jax.numpy as jnp
from jax import lax
from jax.experimental import pallas as pl
from jax.experimental.pallas import tpu as pltpu


LN_EPS = 1e-5  # PyTorch nn.LayerNorm default


def _gelu_exact(x):
    # PyTorch nn.GELU() default is the exact erf-based formulation.
    return 0.5 * x * (1.0 + lax.erf(x * (1.0 / math.sqrt(2.0))))


def _round_up(n, m):
    return ((n + m - 1) // m) * m


def _pick_hidden_tile(hidden, target):
    """Largest lane-aligned tile <= target that divides `hidden` exactly.

    The hidden axis is a reduction axis: a ragged last block would feed
    unspecified padding into the accumulator, so the tile must divide exactly.
    """
    if hidden % 128 == 0:
        cand = max(128, (min(target, hidden) // 128) * 128)
        while hidden % cand != 0:
            cand -= 128
        return cand
    return hidden  # fall back to no hidden tiling for non-lane-aligned widths


def prenorm_ffn_kernel(x_ref, g_ref, bln_ref, w1_ref, b1_ref, w2_ref, b2_ref,
                       o_ref, xn_ref, acc_ref):
    k = pl.program_id(1)

    @pl.when(k == 0)
    def _init():
        # LayerNorm over the feature dim, computed in f32 for stability, then
        # cached in the MXU operand dtype so it is not recomputed per k-step.
        x = x_ref[...].astype(jnp.float32)
        mu = jnp.mean(x, axis=-1, keepdims=True)
        xc = x - mu
        var = jnp.mean(xc * xc, axis=-1, keepdims=True)
        xn = xc * lax.rsqrt(var + LN_EPS)
        xn = xn * g_ref[...].astype(jnp.float32) + bln_ref[...].astype(jnp.float32)
        xn_ref[...] = xn.astype(xn_ref.dtype)
        acc_ref[...] = jnp.zeros_like(acc_ref)

    # Linear 1 on this hidden tile: (tm, dim) @ (dim, th) + (1, th), f32 accumulate.
    h = jnp.dot(xn_ref[...], w1_ref[...], preferred_element_type=jnp.float32)
    h = h + b1_ref[...].astype(jnp.float32)
    # GELU (exact, matches nn.GELU default); elementwise over hidden, so
    # applying it per hidden tile before the partial second matmul is exact.
    h = _gelu_exact(h)
    # Dropout(p=0.0) is the identity -> elided.
    # Partial Linear 2: (tm, th) @ (th, dim) accumulated over hidden tiles.
    acc_ref[...] += jnp.dot(h.astype(w2_ref.dtype), w2_ref[...],
                            preferred_element_type=jnp.float32)

    @pl.when(k == pl.num_programs(1) - 1)
    def _finalize():
        o_ref[...] = (acc_ref[...] + b2_ref[...].astype(jnp.float32)).astype(o_ref.dtype)


def pre_norm_feed_forward(x, gamma, beta, w1, b1, w2, b2, *, tm=256, th=256):
    """PreNorm(dim, FeedForward(dim, hidden)) forward.

    x: (B, S, dim). gamma/beta: (dim,) LayerNorm affine.
    w1: (dim, hidden), b1: (hidden,), w2: (hidden, dim), b2: (dim,)
    (weights pre-transposed to (in, out) so the kernel does x @ W + b).
    """
    B, S, dim = x.shape
    hidden = w1.shape[1]
    assert w1.shape == (dim, hidden) and w2.shape == (hidden, dim)
    M = B * S

    # Row tile: sublane-aligned (multiple of 8), clamped to the padded row count.
    tm = _round_up(max(8, min(tm, _round_up(M, 8))), 8)
    # Hidden tile: lane-aligned divisor of hidden (reduction axis must not be ragged).
    th = _pick_hidden_tile(hidden, th)
    grid = (pl.cdiv(M, tm), hidden // th)

    x2d = x.reshape(M, dim)
    gamma2d = gamma.reshape(1, dim)
    beta2d = beta.reshape(1, dim)
    b1_2d = b1.reshape(1, hidden)
    b2_2d = b2.reshape(1, dim)

    compute_dtype = w1.dtype  # MXU operand dtype (bf16 fast path if weights are bf16)

    # VMEM budget: double-buffered tiles + scratch, with ~50% headroom.
    x_item = jnp.dtype(x.dtype).itemsize
    w_item = jnp.dtype(w1.dtype).itemsize
    c_item = jnp.dtype(compute_dtype).itemsize
    est = (2 * tm * dim * x_item                 # x tiles
           + 2 * (dim * th + th) * w_item        # W1 + b1 tiles
           + 2 * th * dim * w_item               # W2 tiles
           + 3 * 2 * dim * 4                     # gamma, beta, b2 (small)
           + 2 * tm * dim * x_item               # out tiles
           + tm * dim * (c_item + 4))            # xn scratch + f32 accumulator
    vmem_limit = int(min(max(est * 3 // 2, 32 * 1024 * 1024), 100 * 1024 * 1024))

    def _bytes(a):
        return a.size * jnp.dtype(a.dtype).itemsize

    cost = pl.CostEstimate(
        flops=4 * M * dim * hidden + 8 * M * dim,      # two matmuls + LayerNorm-ish
        transcendentals=M * hidden,                    # erf per hidden activation
        bytes_accessed=(_bytes(x2d) + _bytes(w1) + _bytes(w2) + _bytes(b1_2d)
                        + _bytes(b2_2d) + _bytes(gamma2d) + _bytes(beta2d)
                        + M * dim * x_item),
    )

    out2d = pl.pallas_call(
        prenorm_ffn_kernel,
        out_shape=jax.ShapeDtypeStruct((M, dim), x.dtype),
        grid_spec=pltpu.PrefetchScalarGridSpec(
            num_scalar_prefetch=0,
            grid=grid,
            in_specs=[
                pl.BlockSpec((tm, dim), lambda i, k: (i, 0)),    # x row tile
                pl.BlockSpec((1, dim), lambda i, k: (0, 0)),     # LN gamma
                pl.BlockSpec((1, dim), lambda i, k: (0, 0)),     # LN beta
                pl.BlockSpec((dim, th), lambda i, k: (0, k)),    # W1 hidden tile
                pl.BlockSpec((1, th), lambda i, k: (0, k)),      # b1 hidden tile
                pl.BlockSpec((th, dim), lambda i, k: (k, 0)),    # W2 hidden tile
                pl.BlockSpec((1, dim), lambda i, k: (0, 0)),     # b2
            ],
            out_specs=pl.BlockSpec((tm, dim), lambda i, k: (i, 0)),
            scratch_shapes=[
                pltpu.VMEM((tm, dim), compute_dtype),   # cached normalized rows
                pltpu.VMEM((tm, dim), jnp.float32),     # f32 output accumulator
            ],
        ),
        compiler_params=pltpu.CompilerParams(
            dimension_semantics=("parallel", "arbitrary"),
            vmem_limit_bytes=vmem_limit,
        ),
        cost_estimate=cost,
    )(x2d, gamma2d, beta2d, w1, b1_2d, w2, b2_2d)

    return out2d.reshape(B, S, dim)


def _reference(x, gamma, beta, w1, b1, w2, b2):
    xf = x.astype(jnp.float32)
    mu = jnp.mean(xf, axis=-1, keepdims=True)
    var = jnp.mean(jnp.square(xf - mu), axis=-1, keepdims=True)
    xn = (xf - mu) * lax.rsqrt(var + LN_EPS) * gamma + beta
    h = jnp.einsum("bsd,dh->bsh", xn, w1, precision=lax.Precision.HIGHEST) + b1
    h = _gelu_exact(h)
    y = jnp.einsum("bsh,hd->bsd", h, w2, precision=lax.Precision.HIGHEST) + b2
    return y.astype(x.dtype)


if __name__ == "__main__":
    # Small but lane-dense shapes (dim, hidden multiples of 128 per review).
    B, S, dim, hidden = 2, 64, 128, 256

    key = jax.random.PRNGKey(0)
    kx, kg, kb, kw1, kb1, kw2, kb2 = jax.random.split(key, 7)

    x = jax.random.normal(kx, (B, S, dim), dtype=jnp.float32)

    # LayerNorm affine (random to exercise the plumbing; PyTorch init is 1/0).
    gamma = jax.random.uniform(kg, (dim,), minval=0.5, maxval=1.5, dtype=jnp.float32)
    beta = jax.random.uniform(kb, (dim,), minval=-0.1, maxval=0.1, dtype=jnp.float32)

    # nn.Linear-style init: U(-1/sqrt(fan_in), 1/sqrt(fan_in)), stored as (in, out).
    lim1 = 1.0 / math.sqrt(dim)
    lim2 = 1.0 / math.sqrt(hidden)
    w1 = jax.random.uniform(kw1, (dim, hidden), minval=-lim1, maxval=lim1, dtype=jnp.float32)
    b1 = jax.random.uniform(kb1, (hidden,), minval=-lim1, maxval=lim1, dtype=jnp.float32)
    w2 = jax.random.uniform(kw2, (hidden, dim), minval=-lim2, maxval=lim2, dtype=jnp.float32)
    b2 = jax.random.uniform(kb2, (dim,), minval=-lim2, maxval=lim2, dtype=jnp.float32)

    # Small tiles here only to exercise multi-block M and the hidden reduction
    # axis at demo size; real-size calls should use the defaults (tm=256, th=256+).
    out = pre_norm_feed_forward(x, gamma, beta, w1, b1, w2, b2, tm=64, th=128)
    out = jax.block_until_ready(out)

    ref = _reference(x, gamma, beta, w1, b1, w2, b2)
    assert out.shape == (B, S, dim)
    max_err = float(jnp.max(jnp.abs(out - ref)))
    assert jnp.allclose(out, ref, atol=1e-4, rtol=1e-4), f"mismatch vs reference (max abs err {max_err})"

    print("KERNEL_OK")
</pallas_src>

<mosaic_0001>
module attributes {stable_mosaic.version = 11 : i64} {
  func.func @prenorm_ffn_kernel(%arg0: i32, %arg1: i32, %arg2: memref<64x128xf32, #tpu.memory_space<vmem>>, %arg3: memref<1x128xf32, #tpu.memory_space<vmem>>, %arg4: memref<1x128xf32, #tpu.memory_space<vmem>>, %arg5: memref<128x128xf32, #tpu.memory_space<vmem>>, %arg6: memref<1x128xf32, #tpu.memory_space<vmem>>, %arg7: memref<128x128xf32, #tpu.memory_space<vmem>>, %arg8: memref<1x128xf32, #tpu.memory_space<vmem>>, %arg9: memref<64x128xf32, #tpu.memory_space<vmem>>, %arg10: memref<64x128xf32, #tpu.memory_space<vmem>>, %arg11: memref<64x128xf32, #tpu.memory_space<vmem>>) attributes {dimension_semantics = [#tpu.dimension_semantics<parallel>, #tpu.dimension_semantics<arbitrary>], iteration_bounds = array<i64: 2, 2>, scalar_prefetch = 0 : i64, scratch_operands = 2 : i64, tpu.core_type = #tpu.core_type<tc>, window_params = [{transform_indices = @transform_0, window_bounds = array<i64: 64, 128>}, {pipeline_mode = #tpu.pipeline_mode<synchronous>, transform_indices = @transform_1, window_bounds = array<i64: 1, 128>}, {pipeline_mode = #tpu.pipeline_mode<synchronous>, transform_indices = @transform_2, window_bounds = array<i64: 1, 128>}, {transform_indices = @transform_3, window_bounds = array<i64: 128, 128>}, {transform_indices = @transform_4, window_bounds = array<i64: 1, 128>}, {transform_indices = @transform_5, window_bounds = array<i64: 128, 128>}, {pipeline_mode = #tpu.pipeline_mode<synchronous>, transform_indices = @transform_6, window_bounds = array<i64: 1, 128>}, {transform_indices = @transform_7, window_bounds = array<i64: 64, 128>}]} {
    %c0_i32 = arith.constant 0 : i32
    %0 = arith.cmpi eq, %arg1, %c0_i32 : i32
    %1 = arith.extui %0 : i1 to i32
    %c0_i32_0 = arith.constant 0 : i32
    %2 = arith.cmpi ne, %1, %c0_i32_0 : i32
    scf.if %2 {
      %c0_17 = arith.constant 0 : index
      %c0_18 = arith.constant 0 : index
      %25 = vector.load %arg2[%c0_17, %c0_18] : memref<64x128xf32, #tpu.memory_space<vmem>>, vector<64x128xf32>
      %cst_19 = arith.constant dense<0.000000e+00> : vector<64xf32>
      %26 = vector.multi_reduction <add>, %25, %cst_19 [1] : vector<64x128xf32> to vector<64xf32>
      %27 = vector.shape_cast %26 : vector<64xf32> to vector<64x1xf32>
      %cst_20 = arith.constant 1.280000e+02 : f32
      %28 = vector.broadcast %cst_20 : f32 to vector<64x1xf32>
      %29 = arith.divf %27, %28 : vector<64x1xf32>
      %30 = vector.broadcast %29 : vector<64x1xf32> to vector<64x128xf32>
      %31 = arith.subf %25, %30 : vector<64x128xf32>
      %32 = arith.mulf %31, %31 : vector<64x128xf32>
      %cst_21 = arith.constant dense<0.000000e+00> : vector<64xf32>
      %33 = vector.multi_reduction <add>, %32, %cst_21 [1] : vector<64x128xf32> to vector<64xf32>
      %34 = vector.shape_cast %33 : vector<64xf32> to vector<64x1xf32>
      %cst_22 = arith.constant 1.280000e+02 : f32
      %35 = vector.broadcast %cst_22 : f32 to vector<64x1xf32>
      %36 = arith.divf %34, %35 : vector<64x1xf32>
      %cst_23 = arith.constant 9.99999974E-6 : f32
      %37 = vector.broadcast %cst_23 : f32 to vector<64x1xf32>
      %38 = arith.addf %36, %37 : vector<64x1xf32>
      %39 = math.rsqrt %38 : vector<64x1xf32>
      %40 = vector.broadcast %39 : vector<64x1xf32> to vector<64x128xf32>
      %41 = arith.mulf %31, %40 : vector<64x128xf32>
      %c0_24 = arith.constant 0 : index
      %c0_25 = arith.constant 0 : index
      %42 = vector.load %arg3[%c0_24, %c0_25] : memref<1x128xf32, #tpu.memory_space<vmem>>, vector<1x128xf32>
      %43 = vector.broadcast %42 : vector<1x128xf32> to vector<64x128xf32>
      %44 = arith.mulf %41, %43 : vector<64x128xf32>
      %c0_26 = arith.constant 0 : index
      %c0_27 = arith.constant 0 : index
      %45 = vector.load %arg4[%c0_26, %c0_27] : memref<1x128xf32, #tpu.memory_space<vmem>>, vector<1x128xf32>
      %46 = vector.broadcast %45 : vector<1x128xf32> to vector<64x128xf32>
      %47 = arith.addf %44, %46 : vector<64x128xf32>
      %c0_28 = arith.constant 0 : index
      %c0_29 = arith.constant 0 : index
      %48 = vector.load %arg10[%c0_28, %c0_29] : memref<64x128xf32, #tpu.memory_space<vmem>>, vector<64x128xf32>
      tpu.vector_store %arg10[%c0_28, %c0_29], %47 {strides = array<i32>} : memref<64x128xf32, #tpu.memory_space<vmem>>, vector<64x128xf32>,
      %cst_30 = arith.constant 0.000000e+00 : f32
      %49 = vector.broadcast %cst_30 : f32 to vector<64x128xf32>
      %c0_31 = arith.constant 0 : index
      %c0_32 = arith.constant 0 : index
      %50 = vector.load %arg11[%c0_31, %c0_32] : memref<64x128xf32, #tpu.memory_space<vmem>>, vector<64x128xf32>
      tpu.vector_store %arg11[%c0_31, %c0_32], %49 {strides = array<i32>} : memref<64x128xf32, #tpu.memory_space<vmem>>, vector<64x128xf32>,
    } else {
    }
    %c0 = arith.constant 0 : index
    %c0_1 = arith.constant 0 : index
    %3 = vector.load %arg10[%c0, %c0_1] : memref<64x128xf32, #tpu.memory_space<vmem>>, vector<64x128xf32>
    %c0_2 = arith.constant 0 : index
    %c0_3 = arith.constant 0 : index
    %4 = vector.load %arg5[%c0_2, %c0_3] : memref<128x128xf32, #tpu.memory_space<vmem>>, vector<128x128xf32>
    %cst = arith.constant dense<0.000000e+00> : vector<64x128xf32>
    %5 = tpu.matmul %3, %4, %cst {dimension_numbers = #tpu.dot_dimension_numbers<[1], [0], [0], [1], [0, 0, 1, 1], [], []>} : vector<64x128xf32>, vector<128x128xf32>, vector<64x128xf32> -> vector<64x128xf32>
    %c0_4 = arith.constant 0 : index
    %c0_5 = arith.constant 0 : index
    %6 = vector.load %arg6[%c0_4, %c0_5] : memref<1x128xf32, #tpu.memory_space<vmem>>, vector<1x128xf32>
    %7 = vector.broadcast %6 : vector<1x128xf32> to vector<64x128xf32>
    %8 = arith.addf %5, %7 : vector<64x128xf32>
    %cst_6 = arith.constant 5.000000e-01 : f32
    %9 = vector.broadcast %cst_6 : f32 to vector<64x128xf32>
    %10 = arith.mulf %9, %8 : vector<64x128xf32>
    %cst_7 = arith.constant 0.707106769 : f32
    %11 = vector.broadcast %cst_7 : f32 to vector<64x128xf32>
    %12 = arith.mulf %8, %11 : vector<64x128xf32>
    %13 = math.erf %12 : vector<64x128xf32>
    %cst_8 = arith.constant 1.000000e+00 : f32
    %14 = vector.broadcast %cst_8 : f32 to vector<64x128xf32>
    %15 = arith.addf %14, %13 : vector<64x128xf32>
    %16 = arith.mulf %10, %15 : vector<64x128xf32>
    %c0_9 = arith.constant 0 : index
    %c0_10 = arith.constant 0 : index
    %17 = vector.load %arg11[%c0_9, %c0_10] : memref<64x128xf32, #tpu.memory_space<vmem>>, vector<64x128xf32>
    %c0_11 = arith.constant 0 : index
    %c0_12 = arith.constant 0 : index
    %18 = vector.load %arg7[%c0_11, %c0_12] : memref<128x128xf32, #tpu.memory_space<vmem>>, vector<128x128xf32>
    %cst_13 = arith.constant dense<0.000000e+00> : vector<64x128xf32>
    %19 = tpu.matmul %16, %18, %cst_13 {dimension_numbers = #tpu.dot_dimension_numbers<[1], [0], [0], [1], [0, 0, 1, 1], [], []>} : vector<64x128xf32>, vector<128x128xf32>, vector<64x128xf32> -> vector<64x128xf32>
    %20 = arith.addf %17, %19 : vector<64x128xf32>
    %c0_14 = arith.constant 0 : index
    %c0_15 = arith.constant 0 : index
    %21 = vector.load %arg11[%c0_14, %c0_15] : memref<64x128xf32, #tpu.memory_space<vmem>>, vector<64x128xf32>
    tpu.vector_store %arg11[%c0_14, %c0_15], %20 {strides = array<i32>} : memref<64x128xf32, #tpu.memory_space<vmem>>, vector<64x128xf32>,
    %c1_i32 = arith.constant 1 : i32
    %22 = arith.cmpi eq, %arg1, %c1_i32 : i32
    %23 = arith.extui %22 : i1 to i32
    %c0_i32_16 = arith.constant 0 : i32
    %24 = arith.cmpi ne, %23, %c0_i32_16 : i32
    scf.if %24 {
      %c0_17 = arith.constant 0 : index
      %c0_18 = arith.constant 0 : index
      %25 = vector.load %arg11[%c0_17, %c0_18] : memref<64x128xf32, #tpu.memory_space<vmem>>, vector<64x128xf32>
      %c0_19 = arith.constant 0 : index
      %c0_20 = arith.constant 0 : index
      %26 = vector.load %arg8[%c0_19, %c0_20] : memref<1x128xf32, #tpu.memory_space<vmem>>, vector<1x128xf32>
      %27 = vector.broadcast %26 : vector<1x128xf32> to vector<64x128xf32>
      %28 = arith.addf %25, %27 : vector<64x128xf32>
      %c0_21 = arith.constant 0 : index
      %c0_22 = arith.constant 0 : index
      %29 = vector.load %arg9[%c0_21, %c0_22] : memref<64x128xf32, #tpu.memory_space<vmem>>, vector<64x128xf32>
      tpu.vector_store %arg9[%c0_21, %c0_22], %28 {strides = array<i32>} : memref<64x128xf32, #tpu.memory_space<vmem>>, vector<64x128xf32>,
    } else {
    }
    return
  }
  func.func @transform_0(%arg0: i32, %arg1: i32) -> (i32, i32) {
    %c0_i32 = arith.constant 0 : i32
    %c0_i32_0 = arith.constant 0 : i32
    return %arg0, %c0_i32 : i32, i32
  }
  func.func @transform_1(%arg0: i32, %arg1: i32) -> (i32, i32) {
    %c0_i32 = arith.constant 0 : i32
    %c0_i32_0 = arith.constant 0 : i32
    %c0_i32_1 = arith.constant 0 : i32
    return %c0_i32, %c0_i32_0 : i32, i32
  }
  func.func @transform_2(%arg0: i32, %arg1: i32) -> (i32, i32) {
    %c0_i32 = arith.constant 0 : i32
    %c0_i32_0 = arith.constant 0 : i32
    %c0_i32_1 = arith.constant 0 : i32
    return %c0_i32, %c0_i32_0 : i32, i32
  }
  func.func @transform_3(%arg0: i32, %arg1: i32) -> (i32, i32) {
    %c0_i32 = arith.constant 0 : i32
    %c0_i32_0 = arith.constant 0 : i32
    return %c0_i32, %arg1 : i32, i32
  }
  func.func @transform_4(%arg0: i32, %arg1: i32) -> (i32, i32) {
    %c0_i32 = arith.constant 0 : i32
    %c0_i32_0 = arith.constant 0 : i32
    return %c0_i32, %arg1 : i32, i32
  }
  func.func @transform_5(%arg0: i32, %arg1: i32) -> (i32, i32) {
    %c0_i32 = arith.constant 0 : i32
    %c0_i32_0 = arith.constant 0 : i32
    return %arg1, %c0_i32 : i32, i32
  }
  func.func @transform_6(%arg0: i32, %arg1: i32) -> (i32, i32) {
    %c0_i32 = arith.constant 0 : i32
    %c0_i32_0 = arith.constant 0 : i32
    %c0_i32_1 = arith.constant 0 : i32
    return %c0_i32, %c0_i32_0 : i32, i32
  }
  func.func @transform_7(%arg0: i32, %arg1: i32) -> (i32, i32) {
    %c0_i32 = arith.constant 0 : i32
    %c0_i32_0 = arith.constant 0 : i32
    return %arg0, %c0_i32 : i32, i32
  }
}

</mosaic_0001>

<llo_original>
// kernel: tpu_custom_call.1
$region0: #{tpu_custom_call.1}
  #allocation0 [shape = 'u32[]', space=smem, size = 0x4, offset = 0x4, fixed_abs, tag = 'smem constant byte address 0x4 - core index']
  #allocation1 [shape = 'u32[72,128]{1,0:T(1,128)}', space=vmem, size = 0x9000, scoped, tag = 'internal scratch']
  #allocation2 [shape = 'f32[64,128]{1,0:T(8,128)}', space=vmem, size = 0x8000, scoped, tag = 'scratch operand']
  #allocation3 [shape = 'f32[64,128]{1,0:T(8,128)}', space=vmem, size = 0x8000, scoped, tag = 'scratch operand']
  %s0 = inlined_call_operand.hbm [shape: f32[128,128], index: 0, kind: input, shape index: {}]
  %s1 = inlined_call_operand.hbm [shape: f32[1,128], index: 1, kind: input, shape index: {}]
  %s2 = inlined_call_operand.vmem [shape: f32[1,128], index: 2, kind: input, shape index: {}]
  %s3 = inlined_call_operand.hbm [shape: f32[128,256], index: 3, kind: input, shape index: {}]
  %s4 = inlined_call_operand.vmem [shape: f32[1,256], index: 4, kind: input, shape index: {}]
  %s5 = inlined_call_operand.hbm [shape: f32[256,128], index: 5, kind: input, shape index: {}]
  %s6 = inlined_call_operand.vmem [shape: f32[1,128], index: 6, kind: input, shape index: {}]
  %s7 = inlined_call_operand.hbm [shape: f32[128,128], index: 7, kind: output, shape index: {}]
  %s8 = sld [smem:[#allocation0]]
  $region85: #{tpu_custom_call.1} parent=0
    _
  %s10 = ssub.s32 1, %s8
  %s11 = scalar_select 0, %s10, %s8
  $region1: #{tpu_custom_call.1} parent=0
    #allocation4 [shape = 'u8[65536]{0}', space=vmem, size = 0x10000, scoped, tag = 'input window, operand 0']
    #allocation5 [shape = 's32[2]{0}', space=sflag, size = 0x8, scoped, tag = 'scoped memory for tpu_custom_call.1']
    #allocation6 [shape = 's32[2]{0}', space=sflag, size = 0x8, scoped, tag = 'scoped memory for tpu_custom_call.1']
    #allocation7 [shape = 'u8[512]{0}', space=vmem, size = 0x400, scoped, tag = 'input window, operand 1, single buffered']
    #allocation8 [shape = 's32[1]{0}', space=sflag, size = 0x4, scoped, tag = 'scoped memory for tpu_custom_call.1']
    #allocation9 [shape = 'u8[131072]{0}', space=vmem, size = 0x20000, scoped, tag = 'input window, operand 3']
    #allocation10 [shape = 'u8[131072]{0}', space=vmem, size = 0x20000, scoped, tag = 'input window, operand 5']
    #allocation11 [shape = 'u8[65536]{0}', space=vmem, size = 0x10000, scoped, tag = 'output window, operand 0']
    %12 = vsyncpa [#allocation5], 0
    %s13 = scalar_lea.sflag [#allocation5], 1
    %14 = vsyncpa %s13, 0
    %15 = vsyncpa [#allocation8], 0
    %16 = vsyncpa [#allocation6], 0
    %s17 = scalar_lea.sflag [#allocation6], 1
    %18 = vsyncpa %s17, 0
    loop: start=0, step=1, limit=6
    $region2: #{tpu_custom_call.1} parent=1 // loop_pre_header
      _
    $region3: #{tpu_custom_call.1} parent=1 // loop_header
      %s20 = sphi 0, %s24
      %p21 = scmp.ge.s32.totalorder %s20, 6
      %s27 = sphi 0, %s39
      %s28 = sphi 0, %s35
      %s29 = sphi 0, %s27
      %s30 = sphi 0, %s28
      %s31 = sphi 0, %s29
      %s32 = sphi 0, %s30
      %s42 = sphi 0, %s44
      %s45 = sphi 0, %s42
      %s46 = sphi 0, %s45
      %s62 = sphi 0, %s46
      %s66 = sphi 0, %s66
      %s68 = sphi 0, %s66
      %s69 = sphi 0, %s68
      %s83 = sphi 0, %s69
      %s87 = sphi 0, %s87
      %s89 = sphi 0, %s87
      %s90 = sphi 0, %s89
      %s104 = sphi 0, %s90
      %s110 = sphi 0, %s112
      %s113 = sphi 0, %s110
      %s114 = sphi 0, %s113
      %s130 = sphi 0, %s114
      %s136 = sphi 0, %s138
      %s139 = sphi 0, %s136
      %s140 = sphi 0, %s139
      %s156 = sphi 0, %s140
      %s162 = sphi 0, %s164
      %s165 = sphi 0, %s162
      %s166 = sphi 0, %s165
      %s182 = sphi 0, %s166
      %s186 = sphi 0, %s186
      %s188 = sphi 0, %s186
      %s189 = sphi 0, %s188
      %s203 = sphi 0, %s189
      %s209 = sphi 0, %s211
      %s212 = sphi 0, %s209
      %s213 = sphi 0, %s212
      %s229 = sphi 0, %s213
    $region4: #{tpu_custom_call.1} parent=1 // loop_header_branch
      %23 = sbr.rel (%p21) target = $region8
    $region5: #{tpu_custom_call.1} parent=1 // loop_body
      %s25 = ssub.s32 %s20, 1
      %s26 = ssub.s32 %s20, 2
      %s33 = sadd.s32 1, %s28
      %p34 = scmp.ge.s32.totalorder %s33, 2
      %s35 = scalar_select %p34, 0, %s33
      %s36 = sadd.s32 1, %s27
      %s37 = scalar_select %p34, %s36, %s27
      %p38 = scmp.ge.s32.totalorder %s37, 2
      %s39 = scalar_select %p38, 0, %s37
      %s40 = ssub.s32 %s27, %s39
      %p41 = scmp.eq.s32.totalorder %s40, 0
      %s43 = sadd.s32 %s42, 1
      %s44 = scalar_select %p41, %s42, %s43
      %p47 = pneg %p41
      %p48 = scmp.eq.s32.totalorder %s20, 3
      %p49 = por %p47, %p48
      %p50 = scmp.ne.s32.totalorder %s42, %s45
      %p51 = scmp.eq.s32.totalorder %s20, 0
      %p52 = por %p50, %p51
      %p53 = scmp.ne.s32.totalorder %s42, %s45
      %p54 = scmp.eq.s32.totalorder %s25, 3
      %p55 = por %p53, %p54
      %p56 = scmp.ne.s32.totalorder %s45, %s46
      %p57 = scmp.eq.s32.totalorder %s25, 0
      %p58 = por %p56, %p57
      %p59 = scmp.ne.s32.totalorder %s45, %s46
      %p60 = scmp.eq.s32.totalorder %s26, 3
      %p61 = por %p59, %p60
      %p63 = scmp.ne.s32.totalorder %s46, %s62
      %p64 = scmp.eq.s32.totalorder %s26, 0
      %p65 = por %p63, %p64
      %s67 = sadd.s32 %s66, 1
      %p70 = scmp.eq.s32.totalorder %s20, 3
      %p71 = scmp.ne.s32.totalorder %s66, %s68
      %p72 = scmp.eq.s32.totalorder %s20, 0
      %p73 = por %p71, %p72
      %p74 = scmp.ne.s32.totalorder %s66, %s68
      %p75 = scmp.eq.s32.totalorder %s25, 3
      %p76 = por %p74, %p75
      %p77 = scmp.ne.s32.totalorder %s68, %s69
      %p78 = scmp.eq.s32.totalorder %s25, 0
      %p79 = por %p77, %p78
      %p80 = scmp.ne.s32.totalorder %s68, %s69
      %p81 = scmp.eq.s32.totalorder %s26, 3
      %p82 = por %p80, %p81
      %p84 = scmp.ne.s32.totalorder %s69, %s83
      %p85 = scmp.eq.s32.totalorder %s26, 0
      %p86 = por %p84, %p85
      %s88 = sadd.s32 %s87, 1
      %p91 = scmp.eq.s32.totalorder %s20, 3
      %p92 = scmp.ne.s32.totalorder %s87, %s89
      %p93 = scmp.eq.s32.totalorder %s20, 0
      %p94 = por %p92, %p93
      %p95 = scmp.ne.s32.totalorder %s87, %s89
      %p96 = scmp.eq.s32.totalorder %s25, 3
      %p97 = por %p95, %p96
      %p98 = scmp.ne.s32.totalorder %s89, %s90
      %p99 = scmp.eq.s32.totalorder %s25, 0
      %p100 = por %p98, %p99
      %p101 = scmp.ne.s32.totalorder %s89, %s90
      %p102 = scmp.eq.s32.totalorder %s26, 3
      %p103 = por %p101, %p102
      %p105 = scmp.ne.s32.totalorder %s90, %s104
      %p106 = scmp.eq.s32.totalorder %s26, 0
      %p107 = por %p105, %p106
      %s108 = ssub.s32 %s28, %s35
      %p109 = scmp.eq.s32.totalorder %s108, 0
      %s111 = sadd.s32 %s110, 1
      %s112 = scalar_select %p109, %s110, %s111
      %p115 = pneg %p109
      %p116 = scmp.eq.s32.totalorder %s20, 3
      %p117 = por %p115, %p116
      %p118 = scmp.ne.s32.totalorder %s110, %s113
      %p119 = scmp.eq.s32.totalorder %s20, 0
      %p120 = por %p118, %p119
      %p121 = scmp.ne.s32.totalorder %s110, %s113
      %p122 = scmp.eq.s32.totalorder %s25, 3
      %p123 = por %p121, %p122
      %p124 = scmp.ne.s32.totalorder %s113, %s114
      %p125 = scmp.eq.s32.totalorder %s25, 0
      %p126 = por %p124, %p125
      %p127 = scmp.ne.s32.totalorder %s113, %s114
      %p128 = scmp.eq.s32.totalorder %s26, 3
      %p129 = por %p127, %p128
      %p131 = scmp.ne.s32.totalorder %s114, %s130
      %p132 = scmp.eq.s32.totalorder %s26, 0
      %p133 = por %p131, %p132
      %s134 = ssub.s32 %s28, %s35
      %p135 = scmp.eq.s32.totalorder %s134, 0
      %s137 = sadd.s32 %s136, 1
      %s138 = scalar_select %p135, %s136, %s137
      %p141 = pneg %p135
      %p142 = scmp.eq.s32.totalorder %s20, 3
      %p143 = por %p141, %p142
      %p144 = scmp.ne.s32.totalorder %s136, %s139
      %p145 = scmp.eq.s32.totalorder %s20, 0
      %p146 = por %p144, %p145
      %p147 = scmp.ne.s32.totalorder %s136, %s139
      %p148 = scmp.eq.s32.totalorder %s25, 3
      %p149 = por %p147, %p148
      %p150 = scmp.ne.s32.totalorder %s139, %s140
      %p151 = scmp.eq.s32.totalorder %s25, 0
      %p152 = por %p150, %p151
      %p153 = scmp.ne.s32.totalorder %s139, %s140
      %p154 = scmp.eq.s32.totalorder %s26, 3
      %p155 = por %p153, %p154
      %p157 = scmp.ne.s32.totalorder %s140, %s156
      %p158 = scmp.eq.s32.totalorder %s26, 0
      %p159 = por %p157, %p158
      %s160 = ssub.s32 %s28, %s35
      %p161 = scmp.eq.s32.totalorder %s160, 0
      %s163 = sadd.s32 %s162, 1
      %s164 = scalar_select %p161, %s162, %s163
      %p167 = pneg %p161
      %p168 = scmp.eq.s32.totalorder %s20, 3
      %p169 = por %p167, %p168
      %p170 = scmp.ne.s32.totalorder %s162, %s165
      %p171 = scmp.eq.s32.totalorder %s20, 0
      %p172 = por %p170, %p171
      %p173 = scmp.ne.s32.totalorder %s162, %s165
      %p174 = scmp.eq.s32.totalorder %s25, 3
      %p175 = por %p173, %p174
      %p176 = scmp.ne.s32.totalorder %s165, %s166
      %p177 = scmp.eq.s32.totalorder %s25, 0
      %p178 = por %p176, %p177
      %p179 = scmp.ne.s32.totalorder %s165, %s166
      %p180 = scmp.eq.s32.totalorder %s26, 3
      %p181 = por %p179, %p180
      %p183 = scmp.ne.s32.totalorder %s166, %s182
      %p184 = scmp.eq.s32.totalorder %s26, 0
      %p185 = por %p183, %p184
      %s187 = sadd.s32 %s186, 1
      %p190 = scmp.eq.s32.totalorder %s20, 3
      %p191 = scmp.ne.s32.totalorder %s186, %s188
      %p192 = scmp.eq.s32.totalorder %s20, 0
      %p193 = por %p191, %p192
      %p194 = scmp.ne.s32.totalorder %s186, %s188
      %p195 = scmp.eq.s32.totalorder %s25, 3
      %p196 = por %p194, %p195
      %p197 = scmp.ne.s32.totalorder %s188, %s189
      %p198 = scmp.eq.s32.totalorder %s25, 0
      %p199 = por %p197, %p198
      %p200 = scmp.ne.s32.totalorder %s188, %s189
      %p201 = scmp.eq.s32.totalorder %s26, 3
      %p202 = por %p200, %p201
      %p204 = scmp.ne.s32.totalorder %s189, %s203
      %p205 = scmp.eq.s32.totalorder %s26, 0
      %p206 = por %p204, %p205
      %s207 = ssub.s32 %s27, %s39
      %p208 = scmp.eq.s32.totalorder %s207, 0
      %s210 = sadd.s32 %s209, 1
      %s211 = scalar_select %p208, %s209, %s210
      %p214 = pneg %p208
      %p215 = scmp.eq.s32.totalorder %s20, 3
      %p216 = por %p214, %p215
      %p217 = scmp.ne.s32.totalorder %s209, %s212
      %p218 = scmp.eq.s32.totalorder %s20, 0
      %p219 = por %p217, %p218
      %p220 = scmp.ne.s32.totalorder %s209, %s212
      %p221 = scmp.eq.s32.totalorder %s25, 3
      %p222 = por %p220, %p221
      %p223 = scmp.ne.s32.totalorder %s212, %s213
      %p224 = scmp.eq.s32.totalorder %s25, 0
      %p225 = por %p223, %p224
      %p226 = scmp.ne.s32.totalorder %s212, %s213
      %p227 = scmp.eq.s32.totalorder %s26, 3
      %p228 = por %p226, %p227
      %p230 = scmp.ne.s32.totalorder %s213, %s229
      %p231 = scmp.eq.s32.totalorder %s26, 0
      %p232 = por %p230, %p231
      %p233 = scmp.le.s32.totalorder 1, %s20
      %p234 = scmp.lt.s32.totalorder %s20, 5
      %p235 = pnand %p233, %p234
      %p236 = pneg %p235
      // Predicated region
      $region9: #{tpu_custom_call.1} parent=5 // pred_check
        _
      $region10: #{tpu_custom_call.1} parent=5 // pred_check_branch
        %238 = sbr.rel (%p235) target = $region12
      $region11: #{tpu_custom_call.1} parent=5 // pred_region
        %s239 = ssub.s32 %s20, 1
        // Predicated region
        $region13: #{tpu_custom_call.1} parent=11 // pred_check
          %p240 = pneg %p79
        $region14: #{tpu_custom_call.1} parent=11 // pred_check_branch
          %242 = sbr.rel (%p240) target = $region16
        $region15: #{tpu_custom_call.1} parent=11 // pred_region
          %244 = vsyncadd [#allocation8], 0
          %s246 = sshll.u32 %s1, 4
          %s247 = int_to_ptr.hbm [resolvable:$true] %s246
          %s248 = sshll.u32 [#allocation7], 4
          %s249 = int_to_ptr.vmem [resolvable:$true] %s248
          %251 = dma.hbm_to_vmem [thread:$0]  %s247, 16, %s249, [#allocation8]
        $region16: #{tpu_custom_call.1} parent=11 // pred_fallthru
          _
        // Predicated region
        $region17: #{tpu_custom_call.1} parent=11 // pred_check
          %p252 = pneg %p100
        $region18: #{tpu_custom_call.1} parent=11 // pred_check_branch
          %254 = sbr.rel (%p252) target = $region20
        $region19: #{tpu_custom_call.1} parent=11 // pred_region
          _
        $region20: #{tpu_custom_call.1} parent=11 // pred_fallthru
          _
        // Predicated region
        $region21: #{tpu_custom_call.1} parent=11 // pred_check
          %p255 = pneg %p199
        $region22: #{tpu_custom_call.1} parent=11 // pred_check_branch
          %257 = sbr.rel (%p255) target = $region24
        $region23: #{tpu_custom_call.1} parent=11 // pred_region
          _
        $region24: #{tpu_custom_call.1} parent=11 // pred_fallthru
          _
      $region12: #{tpu_custom_call.1} parent=5 // pred_fallthru
        _
      %p258 = scmp.lt.s32.totalorder %s20, 4
      // Predicated region
      $region25: #{tpu_custom_call.1} parent=5 // pred_check
        %p259 = pneg %p258
      $region26: #{tpu_custom_call.1} parent=5 // pred_check_branch
        %261 = sbr.rel (%p259) target = $region28
      $region27: #{tpu_custom_call.1} parent=5 // pred_region
        // Predicated region
        $region29: #{tpu_custom_call.1} parent=27 // pred_check
          %p262 = pneg %p52
        $region30: #{tpu_custom_call.1} parent=27 // pred_check_branch
          %264 = sbr.rel (%p262) target = $region32
        $region31: #{tpu_custom_call.1} parent=27 // pred_region
          %s265 = sand.u32 %s20, 1
          %s266 = scalar_lea.sflag [#allocation5], %s265
          %s267 = sand.u32 %s42, 1
          %s268 = smul.addr %s267, 64
          %s269 = scalar_lea.vmem [#allocation4], %s268
          %s270 = smul.u32 8, %s27
          %272 = vsyncadd %s266, 0
          %s273 = smul.addr %s270, 8
          %s274 = scalar_lea.hbm %s0, %s273
          %s275 = sshll.u32 %s274, 4
          %s276 = int_to_ptr.hbm [resolvable:$true] %s275
          %s277 = sshll.u32 %s269, 4
          %s278 = int_to_ptr.vmem [resolvable:$true] %s277
          %283 = dma.hbm_to_vmem [thread:$0]  %s276, 1024, %s278, %s266, 128, 128, 8
        $region32: #{tpu_custom_call.1} parent=27 // pred_fallthru
          _
        // Predicated region
        $region33: #{tpu_custom_call.1} parent=27 // pred_check
          %p284 = pneg %p120
        $region34: #{tpu_custom_call.1} parent=27 // pred_check_branch
          %286 = sbr.rel (%p284) target = $region36
        $region35: #{tpu_custom_call.1} parent=27 // pred_region
          %s287 = sand.u32 %s20, 1
          %s288 = scalar_lea.sflag [#allocation5], %s287
          %s289 = sand.u32 %s110, 1
          %s290 = smul.addr %s289, 128
          %s291 = scalar_lea.vmem [#allocation9], %s290
          %293 = vsyncadd %s288, 0
          %s294 = smul.addr %s28, 8
          %s295 = scalar_lea.hbm %s3, %s294
          %s296 = sshll.u32 %s295, 4
          %s297 = int_to_ptr.hbm [resolvable:$true] %s296
          %s298 = sshll.u32 %s291, 4
          %s299 = int_to_ptr.vmem [resolvable:$true] %s298
          %304 = dma.hbm_to_vmem [thread:$0]  %s297, 2048, %s299, %s288, 256, 128, 8
        $region36: #{tpu_custom_call.1} parent=27 // pred_fallthru
          _
        // Predicated region
        $region37: #{tpu_custom_call.1} parent=27 // pred_check
          %p305 = pneg %p146
        $region38: #{tpu_custom_call.1} parent=27 // pred_check_branch
          %307 = sbr.rel (%p305) target = $region40
        $region39: #{tpu_custom_call.1} parent=27 // pred_region
          %p308 = scmp.lt.s32.totalorder %s28, 1
          %s309 = scalar_select %p308, %s28, 1
          %s310 = scalar_lea.vmem %s4, %s309
        $region40: #{tpu_custom_call.1} parent=27 // pred_fallthru
          _
        // Predicated region
        $region41: #{tpu_custom_call.1} parent=27 // pred_check
          %p311 = pneg %p172
        $region42: #{tpu_custom_call.1} parent=27 // pred_check_branch
          %313 = sbr.rel (%p311) target = $region44
        $region43: #{tpu_custom_call.1} parent=27 // pred_region
          %s314 = sand.u32 %s20, 1
          %s315 = scalar_lea.sflag [#allocation5], %s314
          %s316 = sand.u32 %s162, 1
          %s317 = smul.addr %s316, 128
          %s318 = scalar_lea.vmem [#allocation10], %s317
          %s319 = smul.u32 16, %s28
          %321 = vsyncadd %s315, 0
          %s322 = smul.addr %s319, 8
          %s323 = scalar_lea.hbm %s5, %s322
          %s324 = sshll.u32 %s323, 4
          %s325 = int_to_ptr.hbm [resolvable:$true] %s324
          %s326 = sshll.u32 %s318, 4
          %s327 = int_to_ptr.vmem [resolvable:$true] %s326
          %332 = dma.hbm_to_vmem [thread:$0]  %s325, 2048, %s327, %s315, 128, 128, 8
        $region44: #{tpu_custom_call.1} parent=27 // pred_fallthru
          _
      $region28: #{tpu_custom_call.1} parent=5 // pred_fallthru
        _
      %p333 = scmp.le.s32.totalorder 1, %s20
      %p334 = scmp.lt.s32.totalorder %s20, 5
      %p335 = pnand %p333, %p334
      %p336 = pneg %p335
      // Predicated region
      $region45: #{tpu_custom_call.1} parent=5 // pred_check
        _
      $region46: #{tpu_custom_call.1} parent=5 // pred_check_branch
        %338 = sbr.rel (%p335) target = $region48
      $region47: #{tpu_custom_call.1} parent=5 // pred_region
        %s339 = ssub.s32 %s20, 1
        %s340 = sand.u32 %s25, 1
        %s341 = scalar_lea.sflag [#allocation5], %s340
        %s342 = sand.u32 %s45, 1
        %s343 = smul.addr %s342, 64
        %s344 = scalar_lea.vmem [#allocation4], %s343
        // Predicated region
        $region49: #{tpu_custom_call.1} parent=47 // pred_check
          %p345 = pneg %p58
        $region50: #{tpu_custom_call.1} parent=47 // pred_check_branch
          %347 = sbr.rel (%p345) target = $region52
        $region51: #{tpu_custom_call.1} parent=47 // pred_region
          %349 = dma.done %s341, 1024
        $region52: #{tpu_custom_call.1} parent=47 // pred_fallthru
          _
        // Predicated region
        $region53: #{tpu_custom_call.1} parent=47 // pred_check
          %p350 = pneg %p79
        $region54: #{tpu_custom_call.1} parent=47 // pred_check_branch
          %352 = sbr.rel (%p350) target = $region56
        $region55: #{tpu_custom_call.1} parent=47 // pred_region
          %354 = dma.done [#allocation8], 16
        $region56: #{tpu_custom_call.1} parent=47 // pred_fallthru
          _
        %s355 = sand.u32 %s25, 1
        %s356 = scalar_lea.sflag [#allocation5], %s355
        %s357 = sand.u32 %s113, 1
        %s358 = smul.addr %s357, 128
        %s359 = scalar_lea.vmem [#allocation9], %s358
        // Predicated region
        $region57: #{tpu_custom_call.1} parent=47 // pred_check
          %p360 = pneg %p126
        $region58: #{tpu_custom_call.1} parent=47 // pred_check_branch
          %362 = sbr.rel (%p360) target = $region60
        $region59: #{tpu_custom_call.1} parent=47 // pred_region
          %364 = dma.done %s356, 2048
        $region60: #{tpu_custom_call.1} parent=47 // pred_fallthru
          _
        %s365 = sand.u32 %s25, 1
        %s366 = scalar_lea.sflag [#allocation5], %s365
        %s367 = sand.u32 %s165, 1
        %s368 = smul.addr %s367, 128
        %s369 = scalar_lea.vmem [#allocation10], %s368
        // Predicated region
        $region61: #{tpu_custom_call.1} parent=47 // pred_check
          %p370 = pneg %p178
        $region62: #{tpu_custom_call.1} parent=47 // pred_check_branch
          %372 = sbr.rel (%p370) target = $region64
        $region63: #{tpu_custom_call.1} parent=47 // pred_region
          %374 = dma.done %s366, 2048
        $region64: #{tpu_custom_call.1} parent=47 // pred_fallthru
          _
        %s375 = sand.u32 %s25, 1
        %s376 = scalar_lea.sflag [#allocation5], %s375
        %s377 = sand.u32 %s45, 1
        %s378 = smul.addr %s377, 64
        %s379 = scalar_lea.vmem [#allocation4], %s378
        %p380 = pneg %p58
        %p381 = pneg %p55
        %p382 = pneg %p79
        %p383 = pneg %p76
        %p384 = pneg %p100
        %p385 = pneg %p97
        %s386 = sand.u32 %s25, 1
        %s387 = scalar_lea.sflag [#allocation5], %s386
        %s388 = sand.u32 %s113, 1
        %s389 = smul.addr %s388, 128
        %s390 = scalar_lea.vmem [#allocation9], %s389
        %p391 = pneg %p126
        %p392 = pneg %p123
        %p393 = scmp.lt.s32.totalorder %s30, 1
        %s394 = scalar_select %p393, %s30, 1
        %s395 = scalar_lea.vmem %s4, %s394
        %p396 = pneg %p152
        %p397 = pneg %p149
        %s398 = sand.u32 %s25, 1
        %s399 = scalar_lea.sflag [#allocation5], %s398
        %s400 = sand.u32 %s165, 1
        %s401 = smul.addr %s400, 128
        %s402 = scalar_lea.vmem [#allocation10], %s401
        %p403 = pneg %p178
        %p404 = pneg %p175
        %p405 = pneg %p199
        %p406 = pneg %p196
        %p407 = pneg %p225
        %p408 = pneg %p222
        %s409 = sand.u32 %s212, 1
        %s410 = scalar_lea.sflag [#allocation6], %s409
        %s411 = sand.u32 %s212, 1
        %s412 = smul.addr %s411, 64
        %s413 = scalar_lea.vmem [#allocation11], %s412
        %s414 = smul.u32 8, %s29
        %p415 = scmp.lt.s32.totalorder %s30, 1
        %s416 = scalar_select %p415, %s30, 1
        %s417 = scalar_lea.vmem %s4, %s416
        %s418 = smul.u32 16, %s30
        %s419 = smul.u32 8, %s29
        %p420 = scmp.eq.s32.totalorder %s30, 0
        // Predicated region
        $region65: #{tpu_custom_call.1} parent=47 // pred_check
          %p421 = pneg %p420
        $region66: #{tpu_custom_call.1} parent=47 // pred_check_branch
          %423 = sbr.rel (%p421) target = $region68
        $region67: #{tpu_custom_call.1} parent=47 // pred_region
          %v424 = vld [vmem:[%s344] sm:$0xff]
          %v425 = vld [vmem:[%s344 + $0x8] sm:$0xff]
          %v426 = vld [vmem:[%s344 + $0x10] sm:$0xff]
          %v427 = vld [vmem:[%s344 + $0x18] sm:$0xff]
          %v428 = vld [vmem:[%s344 + $0x20] sm:$0xff]
          %v429 = vld [vmem:[%s344 + $0x28] sm:$0xff]
          %v430 = vld [vmem:[%s344 + $0x30] sm:$0xff]
          %v431 = vld [vmem:[%s344 + $0x38] sm:$0xff]
          %432 = vadd.xlane.f32.xlu0 %v424
          %v433 = vpop.xlane.xlu0 %432
          %434 = vadd.xlane.f32.xlu0 %v425
          %v435 = vpop.xlane.xlu0 %434
          %436 = vadd.xlane.f32.xlu0 %v426
          %v437 = vpop.xlane.xlu0 %436
          %438 = vadd.xlane.f32.xlu0 %v427
          %v439 = vpop.xlane.xlu0 %438
          %440 = vadd.xlane.f32.xlu0 %v428
          %v441 = vpop.xlane.xlu0 %440
          %442 = vadd.xlane.f32.xlu0 %v429
          %v443 = vpop.xlane.xlu0 %442
          %444 = vadd.xlane.f32.xlu0 %v430
          %v445 = vpop.xlane.xlu0 %444
          %446 = vadd.xlane.f32.xlu0 %v431
          %v447 = vpop.xlane.xlu0 %446
          %v448 = vrcp.pop 128.0
          %v449 = vmul.f32 128.0, %v448
          %v450 = vsub.f32 1.0, %v449
          %v451 = vmul.f32 %v448, %v450
          %v452 = vadd.f32 %v448, %v451
          %vm453 = vweird.f32 %v448
          %v454 = vsel %vm453, %v448, %v452
          %v455 = vmul.f32 %v433, %v454
          %v456 = vmul.f32 %v435, %v454
          %v457 = vmul.f32 %v437, %v454
          %v458 = vmul.f32 %v439, %v454
          %v459 = vmul.f32 %v441, %v454
          %v460 = vmul.f32 %v443, %v454
          %v461 = vmul.f32 %v445, %v454
          %v462 = vmul.f32 %v447, %v454
          %v463 = vsub.f32 %v424, %v455
          %v464 = vsub.f32 %v425, %v456
          %v465 = vsub.f32 %v426, %v457
          %v466 = vsub.f32 %v427, %v458
          %v467 = vsub.f32 %v428, %v459
          %v468 = vsub.f32 %v429, %v460
          %v469 = vsub.f32 %v430, %v461
          %v470 = vsub.f32 %v431, %v462
          %v471 = vmul.f32 %v463, %v463
          %v472 = vmul.f32 %v464, %v464
          %v473 = vmul.f32 %v465, %v465
          %v474 = vmul.f32 %v466, %v466
          %v475 = vmul.f32 %v467, %v467
          %v476 = vmul.f32 %v468, %v468
          %v477 = vmul.f32 %v469, %v469
          %v478 = vmul.f32 %v470, %v470
          %479 = vadd.xlane.f32.xlu0 %v471
          %v480 = vpop.xlane.xlu0 %479
          %481 = vadd.xlane.f32.xlu0 %v472
          %v482 = vpop.xlane.xlu0 %481
          %483 = vadd.xlane.f32.xlu0 %v473
          %v484 = vpop.xlane.xlu0 %483
          %485 = vadd.xlane.f32.xlu0 %v474
          %v486 = vpop.xlane.xlu0 %485
          %487 = vadd.xlane.f32.xlu0 %v475
          %v488 = vpop.xlane.xlu0 %487
          %489 = vadd.xlane.f32.xlu0 %v476
          %v490 = vpop.xlane.xlu0 %489
          %491 = vadd.xlane.f32.xlu0 %v477
          %v492 = vpop.xlane.xlu0 %491
          %493 = vadd.xlane.f32.xlu0 %v478
          %v494 = vpop.xlane.xlu0 %493
          %v495 = vmul.f32 %v480, %v454
          %v496 = vmul.f32 %v482, %v454
          %v497 = vmul.f32 %v484, %v454
          %v498 = vmul.f32 %v486, %v454
          %v499 = vmul.f32 %v488, %v454
          %v500 = vmul.f32 %v490, %v454
          %v501 = vmul.f32 %v492, %v454
          %v502 = vmul.f32 %v494, %v454
          %v503 = vadd.f32 %v495, 1e-05
          %v504 = vadd.f32 %v496, 1e-05
          %v505 = vadd.f32 %v497, 1e-05
          %v506 = vadd.f32 %v498, 1e-05
          %v507 = vadd.f32 %v499, 1e-05
          %v508 = vadd.f32 %v500, 1e-05
          %v509 = vadd.f32 %v501, 1e-05
          %v510 = vadd.f32 %v502, 1e-05
          %v511 = vrsqrt.pop %v503
          %v512 = vmul.f32 %v511, %v503
          %v513 = vmul.f32 %v512, %v511
          %v514 = vmul.f32 0.5, %v513
          %v515 = vsub.f32 1.5, %v514
          %v516 = vmul.f32 %v511, %v515
          %vm517 = vweird.f32 %v503
          %vm518 = vweird.f32 %v511
          %vm519 = vmor %vm517, %vm518
          %v520 = vsel %vm519, %v511, %v516
          %v521 = vrsqrt.pop %v504
          %v522 = vmul.f32 %v521, %v504
          %v523 = vmul.f32 %v522, %v521
          %v524 = vmul.f32 0.5, %v523
          %v525 = vsub.f32 1.5, %v524
          %v526 = vmul.f32 %v521, %v525
          %vm527 = vweird.f32 %v504
          %vm528 = vweird.f32 %v521
          %vm529 = vmor %vm527, %vm528
          %v530 = vsel %vm529, %v521, %v526
          %v531 = vrsqrt.pop %v505
          %v532 = vmul.f32 %v531, %v505
          %v533 = vmul.f32 %v532, %v531
          %v534 = vmul.f32 0.5, %v533
          %v535 = vsub.f32 1.5, %v534
          %v536 = vmul.f32 %v531, %v535
          %vm537 = vweird.f32 %v505
          %vm538 = vweird.f32 %v531
          %vm539 = vmor %vm537, %vm538
          %v540 = vsel %vm539, %v531, %v536
          %v541 = vrsqrt.pop %v506
          %v542 = vmul.f32 %v541, %v506
          %v543 = vmul.f32 %v542, %v541
          %v544 = vmul.f32 0.5, %v543
          %v545 = vsub.f32 1.5, %v544
          %v546 = vmul.f32 %v541, %v545
          %vm547 = vweird.f32 %v506
          %vm548 = vweird.f32 %v541
          %vm549 = vmor %vm547, %vm548
          %v550 = vsel %vm549, %v541, %v546
          %v551 = vrsqrt.pop %v507
          %v552 = vmul.f32 %v551, %v507
          %v553 = vmul.f32 %v552, %v551
          %v554 = vmul.f32 0.5, %v553
          %v555 = vsub.f32 1.5, %v554
          %v556 = vmul.f32 %v551, %v555
          %vm557 = vweird.f32 %v507
          %vm558 = vweird.f32 %v551
          %vm559 = vmor %vm557, %vm558
          %v560 = vsel %vm559, %v551, %v556
          %v561 = vrsqrt.pop %v508
          %v562 = vmul.f32 %v561, %v508
          %v563 = vmul.f32 %v562, %v561
          %v564 = vmul.f32 0.5, %v563
          %v565 = vsub.f32 1.5, %v564
          %v566 = vmul.f32 %v561, %v565
          %vm567 = vweird.f32 %v508
          %vm568 = vweird.f32 %v561
          %vm569 = vmor %vm567, %vm568
          %v570 = vsel %vm569, %v561, %v566
          %v571 = vrsqrt.pop %v509
          %v572 = vmul.f32 %v571, %v509
          %v573 = vmul.f32 %v572, %v571
          %v574 = vmul.f32 0.5, %v573
          %v575 = vsub.f32 1.5, %v574
          %v576 = vmul.f32 %v571, %v575
          %vm577 = vweird.f32 %v509
          %vm578 = vweird.f32 %v571
          %vm579 = vmor %vm577, %vm578
          %v580 = vsel %vm579, %v571, %v576
          %v581 = vrsqrt.pop %v510
          %v582 = vmul.f32 %v581, %v510
          %v583 = vmul.f32 %v582, %v581
          %v584 = vmul.f32 0.5, %v583
          %v585 = vsub.f32 1.5, %v584
          %v586 = vmul.f32 %v581, %v585
          %vm587 = vweird.f32 %v510
          %vm588 = vweird.f32 %v581
          %vm589 = vmor %vm587, %vm588
          %v590 = vsel %vm589, %v581, %v586
          %v591 = vmul.f32 %v463, %v520
          %v592 = vmul.f32 %v464, %v530
          %v593 = vmul.f32 %v465, %v540
          %v594 = vmul.f32 %v466, %v550
          %v595 = vmul.f32 %v467, %v560
          %v596 = vmul.f32 %v468, %v570
          %v597 = vmul.f32 %v469, %v580
          %v598 = vmul.f32 %v470, %v590
          %v599 = vld [vmem:[#allocation7] sm:$0x1]
          %v601 = vperm.slane %v599, 0
          %v603 = vmul.f32 %v591, %v601
          %v604 = vmul.f32 %v592, %v601
          %v605 = vmul.f32 %v593, %v601
          %v606 = vmul.f32 %v594, %v601
          %v607 = vmul.f32 %v595, %v601
          %v608 = vmul.f32 %v596, %v601
          %v609 = vmul.f32 %v597, %v601
          %v610 = vmul.f32 %v598, %v601
          %v611 = vld [vmem:[%s2] sm:$0x1]
          %v613 = vperm.slane %v611, 0
          %v615 = vadd.f32 %v603, %v613
          %v616 = vadd.f32 %v604, %v613
          %v617 = vadd.f32 %v605, %v613
          %v618 = vadd.f32 %v606, %v613
          %v619 = vadd.f32 %v607, %v613
          %v620 = vadd.f32 %v608, %v613
          %v621 = vadd.f32 %v609, %v613
          %v622 = vadd.f32 %v610, %v613
          %623 = vst [vmem:[#allocation2] sm:$0xff] %v615
          %624 = vst [vmem:[#allocation2 + $0x8] sm:$0xff] %v616
          %625 = vst [vmem:[#allocation2 + $0x10] sm:$0xff] %v617
          %626 = vst [vmem:[#allocation2 + $0x18] sm:$0xff] %v618
          %627 = vst [vmem:[#allocation2 + $0x20] sm:$0xff] %v619
          %628 = vst [vmem:[#allocation2 + $0x28] sm:$0xff] %v620
          %629 = vst [vmem:[#allocation2 + $0x30] sm:$0xff] %v621
          %630 = vst [vmem:[#allocation2 + $0x38] sm:$0xff] %v622
          %631 = vst [vmem:[#allocation3] sm:$0xff] 0.0
          %632 = vst [vmem:[#allocation3 + $0x8] sm:$0xff] 0.0
          %633 = vst [vmem:[#allocation3 + $0x10] sm:$0xff] 0.0
          %634 = vst [vmem:[#allocation3 + $0x18] sm:$0xff] 0.0
          %635 = vst [vmem:[#allocation3 + $0x20] sm:$0xff] 0.0
          %636 = vst [vmem:[#allocation3 + $0x28] sm:$0xff] 0.0
          %637 = vst [vmem:[#allocation3 + $0x30] sm:$0xff] 0.0
          %638 = vst [vmem:[#allocation3 + $0x38] sm:$0xff] 0.0
        $region68: #{tpu_custom_call.1} parent=47 // pred_fallthru
          _
        %v639 = vld [vmem:[#allocation2] sm:$0xff]
        %v640 = vld [vmem:[#allocation2 + $0x8] sm:$0xff]
        %v641 = vld [vmem:[#allocation2 + $0x10] sm:$0xff]
        %v642 = vld [vmem:[#allocation2 + $0x18] sm:$0xff]
        %v643 = vld [vmem:[#allocation2 + $0x20] sm:$0xff]
        %v644 = vld [vmem:[#allocation2 + $0x28] sm:$0xff]
        %v645 = vld [vmem:[#allocation2 + $0x30] sm:$0xff]
        %v646 = vld [vmem:[#allocation2 + $0x38] sm:$0xff]
        %v647 = vld [vmem:[%s359] sm:$0xff]
        %v648 = vld [vmem:[%s359 + $0x8] sm:$0xff]
        %v649 = vld [vmem:[%s359 + $0x10] sm:$0xff]
        %v650 = vld [vmem:[%s359 + $0x18] sm:$0xff]
        %v651 = vld [vmem:[%s359 + $0x20] sm:$0xff]
        %v652 = vld [vmem:[%s359 + $0x28] sm:$0xff]
        %v653 = vld [vmem:[%s359 + $0x30] sm:$0xff]
        %v654 = vld [vmem:[%s359 + $0x38] sm:$0xff]
        %v655 = vld [vmem:[%s359 + $0x40] sm:$0xff]
        %v656 = vld [vmem:[%s359 + $0x48] sm:$0xff]
        %v657 = vld [vmem:[%s359 + $0x50] sm:$0xff]
        %v658 = vld [vmem:[%s359 + $0x58] sm:$0xff]
        %v659 = vld [vmem:[%s359 + $0x60] sm:$0xff]
        %v660 = vld [vmem:[%s359 + $0x68] sm:$0xff]
        %v661 = vld [vmem:[%s359 + $0x70] sm:$0xff]
        %v662 = vld [vmem:[%s359 + $0x78] sm:$0xff]
        %v663 = vld [vmem:[%s417] sm:$0x1]
        %v665 = vperm.slane %v663, 0
        %667 = vmatpush.msra.mxu0 %v662
        %668 = vmatpush.msra.mxu0 %v661
        %669 = vmatpush.msra.mxu0 %v660
        %670 = vmatpush.msra.mxu0 %v659
        %671 = vmatpush.msra.mxu0 %v658
        %672 = vmatpush.msra.mxu0 %v657
        %673 = vmatpush.msra.mxu0 %v656
        %674 = vmatpush.msra.mxu0 %v655
        %675 = vmatpush.msra.mxu0 %v654
        %676 = vmatpush.msra.mxu0 %v653
        %677 = vmatpush.msra.mxu0 %v652
        %678 = vmatpush.msra.mxu0 %v651
        %679 = vmatpush.msra.mxu0 %v650
        %680 = vmatpush.msra.mxu0 %v649
        %681 = vmatpush.msra.mxu0 %v648
        %682 = vmatpush.msra.mxu0 %v647
        %683 = vmatmul.f32.gmra.mxu0 %v639
        %v684 = vpop.f32.mrf.mxu0
        %v685 = vadd.f32 %v665, %v684
        %686 = vmatmul.f32.gmra.mxu0 %v640
        %v687 = vpop.f32.mrf.mxu0
        %v688 = vadd.f32 %v665, %v687
        %689 = vmatmul.f32.gmra.mxu0 %v641
        %v690 = vpop.f32.mrf.mxu0
        %v691 = vadd.f32 %v665, %v690
        %692 = vmatmul.f32.gmra.mxu0 %v642
        %v693 = vpop.f32.mrf.mxu0
        %v694 = vadd.f32 %v665, %v693
        %695 = vmatmul.f32.gmra.mxu0 %v643
        %v696 = vpop.f32.mrf.mxu0
        %v697 = vadd.f32 %v665, %v696
        %698 = vmatmul.f32.gmra.mxu0 %v644
        %v699 = vpop.f32.mrf.mxu0
        %v700 = vadd.f32 %v665, %v699
        %701 = vmatmul.f32.gmra.mxu0 %v645
        %v702 = vpop.f32.mrf.mxu0
        %v703 = vadd.f32 %v665, %v702
        %704 = vmatmul.f32.gmra.mxu0 %v646
        %v705 = vpop.f32.mrf.mxu0
        %v706 = vadd.f32 %v665, %v705
        %707 = vdwg.mxu0
        %v708 = vmul.f32 %v685, 0.5
        %v709 = vmul.f32 %v688, 0.5
        %v710 = vmul.f32 %v691, 0.5
        %v711 = vmul.f32 %v694, 0.5
        %v712 = vmul.f32 %v697, 0.5
        %v713 = vmul.f32 %v700, 0.5
        %v714 = vmul.f32 %v703, 0.5
        %v715 = vmul.f32 %v706, 0.5
        %v716 = vmul.f32 %v685, 0.70710677
        %v717 = vmul.f32 %v688, 0.70710677
        %v718 = vmul.f32 %v691, 0.70710677
        %v719 = vmul.f32 %v694, 0.70710677
        %v720 = vmul.f32 %v697, 0.70710677
        %v721 = vmul.f32 %v700, 0.70710677
        %v722 = vmul.f32 %v703, 0.70710677
        %v723 = vmul.f32 %v706, 0.70710677
        %v724 = vmul.f32 %v716, %v716
        %v725 = vmin.f32 16.0, %v724
        %v726 = vmul.f32 %v725, 2.1237322e-06
        %v727 = vadd.f32 %v726, 0.00028619796
        %v728 = vmul.f32 %v725, %v727
        %v729 = vadd.f32 %v728, 0.0036580483
        %v730 = vmul.f32 %v725, %v729
        %v731 = vadd.f32 %v730, 0.05243302
        %v732 = vmul.f32 %v725, %v731
        %v733 = vadd.f32 %v732, 0.18741608
        %v734 = vmul.f32 %v725, %v733
        %v735 = vadd.f32 %v734, 1.1283791
        %v736 = vmul.f32 %v716, %v735
        %v737 = vmul.f32 %v725, 3.8918573e-05
        %v738 = vadd.f32 %v737, 0.001143296
        %v739 = vmul.f32 %v725, %v738
        %v740 = vadd.f32 %v739, 0.014752088
        %v741 = vmul.f32 %v725, %v740
        %v742 = vadd.f32 %v741, 0.112945676
        %v743 = vmul.f32 %v725, %v742
        %v744 = vadd.f32 %v743, 0.4994258
        %v745 = vmul.f32 %v725, %v744
        %v746 = vadd.f32 %v745, 1.0
        %v747 = vrcp.pop %v746
        %v748 = vmul.f32 %v746, %v747
        %v749 = vsub.f32 1.0, %v748
        %v750 = vmul.f32 %v747, %v749
        %v751 = vadd.f32 %v747, %v750
        %vm752 = vweird.f32 %v746
        %vm753 = vweird.f32 %v747
        %vm754 = vmor %vm752, %vm753
        %v755 = vsel %vm754, %v747, %v751
        %v756 = vand.u32 2147483647, %v746
        %vm757 = vcmp.eq.f32.partialorder %v756, 8.507059e+37
        %v758 = vand.u32 %v746, 2147483648
        %v759 = vor.u32 1.1754944e-38, %v758
        %v760 = vsel %vm757, %v759, %v755
        %v761 = vmul.f32 %v736, %v760
        %v762 = vmin.f32 %v761, 1.0
        %v763 = vmax.f32 %v762, -1.0
        %v764 = vmul.f32 %v717, %v717
        %v765 = vmin.f32 16.0, %v764
        %v766 = vmul.f32 %v765, 2.1237322e-06
        %v767 = vadd.f32 %v766, 0.00028619796
        %v768 = vmul.f32 %v765, %v767
        %v769 = vadd.f32 %v768, 0.0036580483
        %v770 = vmul.f32 %v765, %v769
        %v771 = vadd.f32 %v770, 0.05243302
        %v772 = vmul.f32 %v765, %v771
        %v773 = vadd.f32 %v772, 0.18741608
        %v774 = vmul.f32 %v765, %v773
        %v775 = vadd.f32 %v774, 1.1283791
        %v776 = vmul.f32 %v717, %v775
        %v777 = vmul.f32 %v765, 3.8918573e-05
        %v778 = vadd.f32 %v777, 0.001143296
        %v779 = vmul.f32 %v765, %v778
        %v780 = vadd.f32 %v779, 0.014752088
        %v781 = vmul.f32 %v765, %v780
        %v782 = vadd.f32 %v781, 0.112945676
        %v783 = vmul.f32 %v765, %v782
        %v784 = vadd.f32 %v783, 0.4994258
        %v785 = vmul.f32 %v765, %v784
        %v786 = vadd.f32 %v785, 1.0
        %v787 = vrcp.pop %v786
        %v788 = vmul.f32 %v786, %v787
        %v789 = vsub.f32 1.0, %v788
        %v790 = vmul.f32 %v787, %v789
        %v791 = vadd.f32 %v787, %v790
        %vm792 = vweird.f32 %v786
        %vm793 = vweird.f32 %v787
        %vm794 = vmor %vm792, %vm793
        %v795 = vsel %vm794, %v787, %v791
        %v796 = vand.u32 2147483647, %v786
        %vm797 = vcmp.eq.f32.partialorder %v796, 8.507059e+37
        %v798 = vand.u32 %v786, 2147483648
        %v799 = vor.u32 1.1754944e-38, %v798
        %v800 = vsel %vm797, %v799, %v795
        %v801 = vmul.f32 %v776, %v800
        %v802 = vmin.f32 %v801, 1.0
        %v803 = vmax.f32 %v802, -1.0
        %v804 = vmul.f32 %v718, %v718
        %v805 = vmin.f32 16.0, %v804
        %v806 = vmul.f32 %v805, 2.1237322e-06
        %v807 = vadd.f32 %v806, 0.00028619796
        %v808 = vmul.f32 %v805, %v807
        %v809 = vadd.f32 %v808, 0.0036580483
        %v810 = vmul.f32 %v805, %v809
        %v811 = vadd.f32 %v810, 0.05243302
        %v812 = vmul.f32 %v805, %v811
        %v813 = vadd.f32 %v812, 0.18741608
        %v814 = vmul.f32 %v805, %v813
        %v815 = vadd.f32 %v814, 1.1283791
        %v816 = vmul.f32 %v718, %v815
        %v817 = vmul.f32 %v805, 3.8918573e-05
        %v818 = vadd.f32 %v817, 0.001143296
        %v819 = vmul.f32 %v805, %v818
        %v820 = vadd.f32 %v819, 0.014752088
        %v821 = vmul.f32 %v805, %v820
        %v822 = vadd.f32 %v821, 0.112945676
        %v823 = vmul.f32 %v805, %v822
        %v824 = vadd.f32 %v823, 0.4994258
        %v825 = vmul.f32 %v805, %v824
        %v826 = vadd.f32 %v825, 1.0
        %v827 = vrcp.pop %v826
        %v828 = vmul.f32 %v826, %v827
        %v829 = vsub.f32 1.0, %v828
        %v830 = vmul.f32 %v827, %v829
        %v831 = vadd.f32 %v827, %v830
        %vm832 = vweird.f32 %v826
        %vm833 = vweird.f32 %v827
        %vm834 = vmor %vm832, %vm833
        %v835 = vsel %vm834, %v827, %v831
        %v836 = vand.u32 2147483647, %v826
        %vm837 = vcmp.eq.f32.partialorder %v836, 8.507059e+37
        %v838 = vand.u32 %v826, 2147483648
        %v839 = vor.u32 1.1754944e-38, %v838
        %v840 = vsel %vm837, %v839, %v835
        %v841 = vmul.f32 %v816, %v840
        %v842 = vmin.f32 %v841, 1.0
        %v843 = vmax.f32 %v842, -1.0
        %v844 = vmul.f32 %v719, %v719
        %v845 = vmin.f32 16.0, %v844
        %v846 = vmul.f32 %v845, 2.1237322e-06
        %v847 = vadd.f32 %v846, 0.00028619796
        %v848 = vmul.f32 %v845, %v847
        %v849 = vadd.f32 %v848, 0.0036580483
        %v850 = vmul.f32 %v845, %v849
        %v851 = vadd.f32 %v850, 0.05243302
        %v852 = vmul.f32 %v845, %v851
        %v853 = vadd.f32 %v852, 0.18741608
        %v854 = vmul.f32 %v845, %v853
        %v855 = vadd.f32 %v854, 1.1283791
        %v856 = vmul.f32 %v719, %v855
        %v857 = vmul.f32 %v845, 3.8918573e-05
        %v858 = vadd.f32 %v857, 0.001143296
        %v859 = vmul.f32 %v845, %v858
        %v860 = vadd.f32 %v859, 0.014752088
        %v861 = vmul.f32 %v845, %v860
        %v862 = vadd.f32 %v861, 0.112945676
        %v863 = vmul.f32 %v845, %v862
        %v864 = vadd.f32 %v863, 0.4994258
        %v865 = vmul.f32 %v845, %v864
        %v866 = vadd.f32 %v865, 1.0
        %v867 = vrcp.pop %v866
        %v868 = vmul.f32 %v866, %v867
        %v869 = vsub.f32 1.0, %v868
        %v870 = vmul.f32 %v867, %v869
        %v871 = vadd.f32 %v867, %v870
        %vm872 = vweird.f32 %v866
        %vm873 = vweird.f32 %v867
        %vm874 = vmor %vm872, %vm873
        %v875 = vsel %vm874, %v867, %v871
        %v876 = vand.u32 2147483647, %v866
        %vm877 = vcmp.eq.f32.partialorder %v876, 8.507059e+37
        %v878 = vand.u32 %v866, 2147483648
        %v879 = vor.u32 1.1754944e-38, %v878
        %v880 = vsel %vm877, %v879, %v875
        %v881 = vmul.f32 %v856, %v880
        %v882 = vmin.f32 %v881, 1.0
        %v883 = vmax.f32 %v882, -1.0
        %v884 = vmul.f32 %v720, %v720
        %v885 = vmin.f32 16.0, %v884
        %v886 = vmul.f32 %v885, 2.1237322e-06
        %v887 = vadd.f32 %v886, 0.00028619796
        %v888 = vmul.f32 %v885, %v887
        %v889 = vadd.f32 %v888, 0.0036580483
        %v890 = vmul.f32 %v885, %v889
        %v891 = vadd.f32 %v890, 0.05243302
        %v892 = vmul.f32 %v885, %v891
        %v893 = vadd.f32 %v892, 0.18741608
        %v894 = vmul.f32 %v885, %v893
        %v895 = vadd.f32 %v894, 1.1283791
        %v896 = vmul.f32 %v720, %v895
        %v897 = vmul.f32 %v885, 3.8918573e-05
        %v898 = vadd.f32 %v897, 0.001143296
        %v899 = vmul.f32 %v885, %v898
        %v900 = vadd.f32 %v899, 0.014752088
        %v901 = vmul.f32 %v885, %v900
        %v902 = vadd.f32 %v901, 0.112945676
        %v903 = vmul.f32 %v885, %v902
        %v904 = vadd.f32 %v903, 0.4994258
        %v905 = vmul.f32 %v885, %v904
        %v906 = vadd.f32 %v905, 1.0
        %v907 = vrcp.pop %v906
        %v908 = vmul.f32 %v906, %v907
        %v909 = vsub.f32 1.0, %v908
        %v910 = vmul.f32 %v907, %v909
        %v911 = vadd.f32 %v907, %v910
        %vm912 = vweird.f32 %v906
        %vm913 = vweird.f32 %v907
        %vm914 = vmor %vm912, %vm913
        %v915 = vsel %vm914, %v907, %v911
        %v916 = vand.u32 2147483647, %v906
        %vm917 = vcmp.eq.f32.partialorder %v916, 8.507059e+37
        %v918 = vand.u32 %v906, 2147483648
        %v919 = vor.u32 1.1754944e-38, %v918
        %v920 = vsel %vm917, %v919, %v915
        %v921 = vmul.f32 %v896, %v920
        %v922 = vmin.f32 %v921, 1.0
        %v923 = vmax.f32 %v922, -1.0
        %v924 = vmul.f32 %v721, %v721
        %v925 = vmin.f32 16.0, %v924
        %v926 = vmul.f32 %v925, 2.1237322e-06
        %v927 = vadd.f32 %v926, 0.00028619796
        %v928 = vmul.f32 %v925, %v927
        %v929 = vadd.f32 %v928, 0.0036580483
        %v930 = vmul.f32 %v925, %v929
        %v931 = vadd.f32 %v930, 0.05243302
        %v932 = vmul.f32 %v925, %v931
        %v933 = vadd.f32 %v932, 0.18741608
        %v934 = vmul.f32 %v925, %v933
        %v935 = vadd.f32 %v934, 1.1283791
        %v936 = vmul.f32 %v721, %v935
        %v937 = vmul.f32 %v925, 3.8918573e-05
        %v938 = vadd.f32 %v937, 0.001143296
        %v939 = vmul.f32 %v925, %v938
        %v940 = vadd.f32 %v939, 0.014752088
        %v941 = vmul.f32 %v925, %v940
        %v942 = vadd.f32 %v941, 0.112945676
        %v943 = vmul.f32 %v925, %v942
        %v944 = vadd.f32 %v943, 0.4994258
        %v945 = vmul.f32 %v925, %v944
        %v946 = vadd.f32 %v945, 1.0
        %v947 = vrcp.pop %v946
        %v948 = vmul.f32 %v946, %v947
        %v949 = vsub.f32 1.0, %v948
        %v950 = vmul.f32 %v947, %v949
        %v951 = vadd.f32 %v947, %v950
        %vm952 = vweird.f32 %v946
        %vm953 = vweird.f32 %v947
        %vm954 = vmor %vm952, %vm953
        %v955 = vsel %vm954, %v947, %v951
        %v956 = vand.u32 2147483647, %v946
        %vm957 = vcmp.eq.f32.partialorder %v956, 8.507059e+37
        %v958 = vand.u32 %v946, 2147483648
        %v959 = vor.u32 1.1754944e-38, %v958
        %v960 = vsel %vm957, %v959, %v955
        %v961 = vmul.f32 %v936, %v960
        %v962 = vmin.f32 %v961, 1.0
        %v963 = vmax.f32 %v962, -1.0
        %v964 = vmul.f32 %v722, %v722
        %v965 = vmin.f32 16.0, %v964
        %v966 = vmul.f32 %v965, 2.1237322e-06
        %v967 = vadd.f32 %v966, 0.00028619796
        %v968 = vmul.f32 %v965, %v967
        %v969 = vadd.f32 %v968, 0.0036580483
        %v970 = vmul.f32 %v965, %v969
        %v971 = vadd.f32 %v970, 0.05243302
        %v972 = vmul.f32 %v965, %v971
        %v973 = vadd.f32 %v972, 0.18741608
        %v974 = vmul.f32 %v965, %v973
        %v975 = vadd.f32 %v974, 1.1283791
        %v976 = vmul.f32 %v722, %v975
        %v977 = vmul.f32 %v965, 3.8918573e-05
        %v978 = vadd.f32 %v977, 0.001143296
        %v979 = vmul.f32 %v965, %v978
        %v980 = vadd.f32 %v979, 0.014752088
        %v981 = vmul.f32 %v965, %v980
        %v982 = vadd.f32 %v981, 0.112945676
        %v983 = vmul.f32 %v965, %v982
        %v984 = vadd.f32 %v983, 0.4994258
        %v985 = vmul.f32 %v965, %v984
        %v986 = vadd.f32 %v985, 1.0
        %v987 = vrcp.pop %v986
        %v988 = vmul.f32 %v986, %v987
        %v989 = vsub.f32 1.0, %v988
        %v990 = vmul.f32 %v987, %v989
        %v991 = vadd.f32 %v987, %v990
        %vm992 = vweird.f32 %v986
        %vm993 = vweird.f32 %v987
        %vm994 = vmor %vm992, %vm993
        %v995 = vsel %vm994, %v987, %v991
        %v996 = vand.u32 2147483647, %v986
        %vm997 = vcmp.eq.f32.partialorder %v996, 8.507059e+37
        %v998 = vand.u32 %v986, 2147483648
        %v999 = vor.u32 1.1754944e-38, %v998
        %v1000 = vsel %vm997, %v999, %v995
        %v1001 = vmul.f32 %v976, %v1000
        %v1002 = vmin.f32 %v1001, 1.0
        %v1003 = vmax.f32 %v1002, -1.0
        %v1004 = vmul.f32 %v723, %v723
        %v1005 = vmin.f32 16.0, %v1004
        %v1006 = vmul.f32 %v1005, 2.1237322e-06
        %v1007 = vadd.f32 %v1006, 0.00028619796
        %v1008 = vmul.f32 %v1005, %v1007
        %v1009 = vadd.f32 %v1008, 0.0036580483
        %v1010 = vmul.f32 %v1005, %v1009
        %v1011 = vadd.f32 %v1010, 0.05243302
        %v1012 = vmul.f32 %v1005, %v1011
        %v1013 = vadd.f32 %v1012, 0.18741608
        %v1014 = vmul.f32 %v1005, %v1013
        %v1015 = vadd.f32 %v1014, 1.1283791
        %v1016 = vmul.f32 %v723, %v1015
        %v1017 = vmul.f32 %v1005, 3.8918573e-05
        %v1018 = vadd.f32 %v1017, 0.001143296
        %v1019 = vmul.f32 %v1005, %v1018
        %v1020 = vadd.f32 %v1019, 0.014752088
        %v1021 = vmul.f32 %v1005, %v1020
        %v1022 = vadd.f32 %v1021, 0.112945676
        %v1023 = vmul.f32 %v1005, %v1022
        %v1024 = vadd.f32 %v1023, 0.4994258
        %v1025 = vmul.f32 %v1005, %v1024
        %v1026 = vadd.f32 %v1025, 1.0
        %v1027 = vrcp.pop %v1026
        %v1028 = vmul.f32 %v1026, %v1027
        %v1029 = vsub.f32 1.0, %v1028
        %v1030 = vmul.f32 %v1027, %v1029
        %v1031 = vadd.f32 %v1027, %v1030
        %vm1032 = vweird.f32 %v1026
        %vm1033 = vweird.f32 %v1027
        %vm1034 = vmor %vm1032, %vm1033
        %v1035 = vsel %vm1034, %v1027, %v1031
        %v1036 = vand.u32 2147483647, %v1026
        %vm1037 = vcmp.eq.f32.partialorder %v1036, 8.507059e+37
        %v1038 = vand.u32 %v1026, 2147483648
        %v1039 = vor.u32 1.1754944e-38, %v1038
        %v1040 = vsel %vm1037, %v1039, %v1035
        %v1041 = vmul.f32 %v1016, %v1040
        %v1042 = vmin.f32 %v1041, 1.0
        %v1043 = vmax.f32 %v1042, -1.0
        %v1044 = vadd.f32 %v763, 1.0
        %v1045 = vadd.f32 %v803, 1.0
        %v1046 = vadd.f32 %v843, 1.0
        %v1047 = vadd.f32 %v883, 1.0
        %v1048 = vadd.f32 %v923, 1.0
        %v1049 = vadd.f32 %v963, 1.0
        %v1050 = vadd.f32 %v1003, 1.0
        %v1051 = vadd.f32 %v1043, 1.0
        %v1052 = vmul.f32 %v708, %v1044
        %v1053 = vmul.f32 %v709, %v1045
        %v1054 = vmul.f32 %v710, %v1046
        %v1055 = vmul.f32 %v711, %v1047
        %v1056 = vmul.f32 %v712, %v1048
        %v1057 = vmul.f32 %v713, %v1049
        %v1058 = vmul.f32 %v714, %v1050
        %v1059 = vmul.f32 %v715, %v1051
        %v1060 = vld [vmem:[#allocation3] sm:$0xff]
        %v1061 = vld [vmem:[#allocation3 + $0x8] sm:$0xff]
        %v1062 = vld [vmem:[#allocation3 + $0x10] sm:$0xff]
        %v1063 = vld [vmem:[#allocation3 + $0x18] sm:$0xff]
        %v1064 = vld [vmem:[#allocation3 + $0x20] sm:$0xff]
        %v1065 = vld [vmem:[#allocation3 + $0x28] sm:$0xff]
        %v1066 = vld [vmem:[#allocation3 + $0x30] sm:$0xff]
        %v1067 = vld [vmem:[#allocation3 + $0x38] sm:$0xff]
        %v1068 = vld [vmem:[%s369] sm:$0xff]
        %v1069 = vld [vmem:[%s369 + $0x8] sm:$0xff]
        %v1070 = vld [vmem:[%s369 + $0x10] sm:$0xff]
        %v1071 = vld [vmem:[%s369 + $0x18] sm:$0xff]
        %v1072 = vld [vmem:[%s369 + $0x20] sm:$0xff]
        %v1073 = vld [vmem:[%s369 + $0x28] sm:$0xff]
        %v1074 = vld [vmem:[%s369 + $0x30] sm:$0xff]
        %v1075 = vld [vmem:[%s369 + $0x38] sm:$0xff]
        %v1076 = vld [vmem:[%s369 + $0x40] sm:$0xff]
        %v1077 = vld [vmem:[%s369 + $0x48] sm:$0xff]
        %v1078 = vld [vmem:[%s369 + $0x50] sm:$0xff]
        %v1079 = vld [vmem:[%s369 + $0x58] sm:$0xff]
        %v1080 = vld [vmem:[%s369 + $0x60] sm:$0xff]
        %v1081 = vld [vmem:[%s369 + $0x68] sm:$0xff]
        %v1082 = vld [vmem:[%s369 + $0x70] sm:$0xff]
        %v1083 = vld [vmem:[%s369 + $0x78] sm:$0xff]
        %1084 = vmatpush.msra.mxu0 %v1083
        %1085 = vmatpush.msra.mxu0 %v1082
        %1086 = vmatpush.msra.mxu0 %v1081
        %1087 = vmatpush.msra.mxu0 %v1080
        %1088 = vmatpush.msra.mxu0 %v1079
        %1089 = vmatpush.msra.mxu0 %v1078
        %1090 = vmatpush.msra.mxu0 %v1077
        %1091 = vmatpush.msra.mxu0 %v1076
        %1092 = vmatpush.msra.mxu0 %v1075
        %1093 = vmatpush.msra.mxu0 %v1074
        %1094 = vmatpush.msra.mxu0 %v1073
        %1095 = vmatpush.msra.mxu0 %v1072
        %1096 = vmatpush.msra.mxu0 %v1071
        %1097 = vmatpush.msra.mxu0 %v1070
        %1098 = vmatpush.msra.mxu0 %v1069
        %1099 = vmatpush.msra.mxu0 %v1068
        %1100 = vmatmul.f32.gmra.mxu0 %v1052
        %v1101 = vpop.f32.mrf.mxu0
        %v1102 = vadd.f32 0.0, %v1101
        %1103 = vmatmul.f32.gmra.mxu0 %v1053
        %v1104 = vpop.f32.mrf.mxu0
        %v1105 = vadd.f32 0.0, %v1104
        %1106 = vmatmul.f32.gmra.mxu0 %v1054
        %v1107 = vpop.f32.mrf.mxu0
        %v1108 = vadd.f32 0.0, %v1107
        %1109 = vmatmul.f32.gmra.mxu0 %v1055
        %v1110 = vpop.f32.mrf.mxu0
        %v1111 = vadd.f32 0.0, %v1110
        %1112 = vmatmul.f32.gmra.mxu0 %v1056
        %v1113 = vpop.f32.mrf.mxu0
        %v1114 = vadd.f32 0.0, %v1113
        %1115 = vmatmul.f32.gmra.mxu0 %v1057
        %v1116 = vpop.f32.mrf.mxu0
        %v1117 = vadd.f32 0.0, %v1116
        %1118 = vmatmul.f32.gmra.mxu0 %v1058
        %v1119 = vpop.f32.mrf.mxu0
        %v1120 = vadd.f32 0.0, %v1119
        %1121 = vmatmul.f32.gmra.mxu0 %v1059
        %v1122 = vpop.f32.mrf.mxu0
        %v1123 = vadd.f32 0.0, %v1122
        %1124 = vdwg.mxu0
        %v1125 = vadd.f32 %v1060, %v1102
        %v1126 = vadd.f32 %v1061, %v1105
        %v1127 = vadd.f32 %v1062, %v1108
        %v1128 = vadd.f32 %v1063, %v1111
        %v1129 = vadd.f32 %v1064, %v1114
        %v1130 = vadd.f32 %v1065, %v1117
        %v1131 = vadd.f32 %v1066, %v1120
        %v1132 = vadd.f32 %v1067, %v1123
        %1133 = vst [vmem:[#allocation3] sm:$0xff] %v1125
        %1134 = vst [vmem:[#allocation3 + $0x8] sm:$0xff] %v1126
        %1135 = vst [vmem:[#allocation3 + $0x10] sm:$0xff] %v1127
        %1136 = vst [vmem:[#allocation3 + $0x18] sm:$0xff] %v1128
        %1137 = vst [vmem:[#allocation3 + $0x20] sm:$0xff] %v1129
        %1138 = vst [vmem:[#allocation3 + $0x28] sm:$0xff] %v1130
        %1139 = vst [vmem:[#allocation3 + $0x30] sm:$0xff] %v1131
        %1140 = vst [vmem:[#allocation3 + $0x38] sm:$0xff] %v1132
        %p1141 = scmp.eq.s32.totalorder %s30, 1
        // Predicated region
        $region69: #{tpu_custom_call.1} parent=47 // pred_check
          %p1142 = pneg %p1141
        $region70: #{tpu_custom_call.1} parent=47 // pred_check_branch
          %1144 = sbr.rel (%p1142) target = $region72
        $region71: #{tpu_custom_call.1} parent=47 // pred_region
          %v1145 = vld [vmem:[#allocation3] sm:$0xff]
          %v1146 = vld [vmem:[#allocation3 + $0x8] sm:$0xff]
          %v1147 = vld [vmem:[#allocation3 + $0x10] sm:$0xff]
          %v1148 = vld [vmem:[#allocation3 + $0x18] sm:$0xff]
          %v1149 = vld [vmem:[#allocation3 + $0x20] sm:$0xff]
          %v1150 = vld [vmem:[#allocation3 + $0x28] sm:$0xff]
          %v1151 = vld [vmem:[#allocation3 + $0x30] sm:$0xff]
          %v1152 = vld [vmem:[#allocation3 + $0x38] sm:$0xff]
          %v1153 = vld [vmem:[%s6] sm:$0x1]
          %v1155 = vperm.slane %v1153, 0
          %v1157 = vadd.f32 %v1145, %v1155
          %v1158 = vadd.f32 %v1146, %v1155
          %v1159 = vadd.f32 %v1147, %v1155
          %v1160 = vadd.f32 %v1148, %v1155
          %v1161 = vadd.f32 %v1149, %v1155
          %v1162 = vadd.f32 %v1150, %v1155
          %v1163 = vadd.f32 %v1151, %v1155
          %v1164 = vadd.f32 %v1152, %v1155
          %1165 = vst [vmem:[%s413] sm:$0xff] %v1157
          %1166 = vst [vmem:[%s413 + $0x8] sm:$0xff] %v1158
          %1167 = vst [vmem:[%s413 + $0x10] sm:$0xff] %v1159
          %1168 = vst [vmem:[%s413 + $0x18] sm:$0xff] %v1160
          %1169 = vst [vmem:[%s413 + $0x20] sm:$0xff] %v1161
          %1170 = vst [vmem:[%s413 + $0x28] sm:$0xff] %v1162
          %1171 = vst [vmem:[%s413 + $0x30] sm:$0xff] %v1163
          %1172 = vst [vmem:[%s413 + $0x38] sm:$0xff] %v1164
        $region72: #{tpu_custom_call.1} parent=47 // pred_fallthru
          _
        %s1173 = sand.u32 %s212, 1
        %s1174 = scalar_lea.sflag [#allocation6], %s1173
        %s1175 = sand.u32 %s212, 1
        %s1176 = smul.addr %s1175, 64
        %s1177 = scalar_lea.vmem [#allocation11], %s1176
        // Predicated region
        $region73: #{tpu_custom_call.1} parent=47 // pred_check
          %p1178 = pneg %p222
        $region74: #{tpu_custom_call.1} parent=47 // pred_check_branch
          %1180 = sbr.rel (%p1178) target = $region76
        $region75: #{tpu_custom_call.1} parent=47 // pred_region
          %s1181 = smul.u32 8, %s29
          %1183 = vsyncadd %s1174, 0
          %s1184 = smul.addr %s1181, 8
          %s1185 = scalar_lea.hbm %s7, %s1184
          %s1186 = sshll.u32 %s1177, 4
          %s1187 = int_to_ptr.vmem [resolvable:$true] %s1186
          %s1188 = sshll.u32 %s1185, 4
          %s1189 = int_to_ptr.hbm [resolvable:$true] %s1188
          %1194 = dma.vmem_to_hbm [thread:$0]  %s1187, 1024, %s1189, %s1174, 128, 128, 8
        $region76: #{tpu_custom_call.1} parent=47 // pred_fallthru
          _
      $region48: #{tpu_custom_call.1} parent=5 // pred_fallthru
        _
      %p1195 = scmp.le.s32.totalorder 2, %s20
      // Predicated region
      $region77: #{tpu_custom_call.1} parent=5 // pred_check
        %p1196 = pneg %p1195
      $region78: #{tpu_custom_call.1} parent=5 // pred_check_branch
        %1198 = sbr.rel (%p1196) target = $region80
      $region79: #{tpu_custom_call.1} parent=5 // pred_region
        %s1199 = ssub.s32 %s20, 2
        // Predicated region
        $region81: #{tpu_custom_call.1} parent=79 // pred_check
          %p1200 = pneg %p228
        $region82: #{tpu_custom_call.1} parent=79 // pred_check_branch
          %1202 = sbr.rel (%p1200) target = $region84
        $region83: #{tpu_custom_call.1} parent=79 // pred_region
          %s1203 = sand.u32 %s213, 1
          %s1204 = scalar_lea.sflag [#allocation6], %s1203
          %s1205 = sand.u32 %s213, 1
          %s1206 = smul.addr %s1205, 64
          %s1207 = scalar_lea.vmem [#allocation11], %s1206
          %1209 = dma.done %s1204, 1024
        $region84: #{tpu_custom_call.1} parent=79 // pred_fallthru
          _
      $region80: #{tpu_custom_call.1} parent=5 // pred_fallthru
        _
    $region6: #{tpu_custom_call.1} parent=1 // loop_footer
      %s24 = sadd.s32 1, %s20
    $region7: #{tpu_custom_call.1} parent=1 // loop_footer_branch
      %19 = sbr.rel target = $region3
    $region8: #{tpu_custom_call.1} parent=1 // loop_exit
      _
    %1210 = vsyncpa [#allocation5], 1
    %s1211 = scalar_lea.sflag [#allocation5], 1
    %1212 = vsyncpa %s1211, 1
    %1213 = vsyncpa [#allocation8], 1
    %1214 = vsyncpa [#allocation6], 1
    %s1215 = scalar_lea.sflag [#allocation6], 1
    %1216 = vsyncpa %s1215, 1

</llo_original>
